<compile_context>
chip_gen: v7x
topology: tpu7x:2x2x1
jax: 0.10.0
libtpu: 0.0.40
codegen_flags: <defaults>
</compile_context>

<pallas_src>
import math

import jax
import jax.numpy as jnp
from jax import lax
from jax.experimental import pallas as pl
from jax.experimental.pallas import tpu as pltpu

_INV_SQRT_2 = 1.0 / math.sqrt(2.0)
_INV_SQRT_2PI = 1.0 / math.sqrt(2.0 * math.pi)


def _moacq_kernel(x_ref, w_ref, c_ref, o_ref):
    # x_ref: (TB, D)    design points, natural layout
    # w_ref: (2Mp, D)   fused head weights, rows [0:Mp]=W_mean^T, [Mp:2Mp]=W_std^T
    #                   (each head zero-padded to Mp rows, Mp a multiple of 8)
    # c_ref: (2Mp, 2)   col 0 = [b_mean; b_std], col 1 = [w_obj; best_f] (pads 0)
    # o_ref: (1, TB)    lane-dense acquisition values
    mp = w_ref.shape[0] // 2

    # Single fused "NT" MXU pass: contract D on both operands so the batch
    # lands on the lane axis.  f32 accumulation.
    heads = lax.dot_general(
        w_ref[...], x_ref[...],
        dimension_numbers=(((1,), (1,)), ((), ())),
        preferred_element_type=jnp.float32)                      # (2Mp, TB)
    c = c_ref[...].astype(jnp.float32)                           # (2Mp, 2)
    heads = heads + c[:, 0:1]                                    # + [b_mean; b_std]

    mean = heads[:mp, :]                                         # (Mp, TB)
    pre_s = heads[mp:, :]                                        # (Mp, TB)
    w_obj = c[:mp, 1:2]                                          # (Mp, 1)
    best_f = c[mp:, 1:2]                                         # (Mp, 1)

    # Numerically stable softplus; the inner minimum() keeps the untaken branch
    # finite even for garbage lanes of a partial (OOB-padded) last tile.
    sigma = jnp.where(pre_s > 20.0, pre_s,
                      jnp.log1p(jnp.exp(jnp.minimum(pre_s, 20.0)))) + 1e-6

    inv_sigma = pl.reciprocal(sigma, approx=True)                # EUP slot
    diff = mean - best_f
    u = diff * inv_sigma
    cdf = 0.5 * (1.0 + lax.erf(u * _INV_SQRT_2))                 # Phi(u)
    pdf = _INV_SQRT_2PI * jnp.exp(-0.5 * u * u)                  # phi(u)
    # EI = sigma*(u*Phi + phi) == diff*Phi + sigma*phi  (less recip-error)
    ei = diff * cdf + sigma * pdf                                # (Mp, TB)

    # Weighted reduction over the (small, zero-padded) objective/sublane axis
    # -> lane-dense store; padded objective rows have w_obj == 0.
    o_ref[...] = jnp.sum(ei * w_obj, axis=0, keepdims=True).astype(o_ref.dtype)


def _num_tensorcores():
    """2 on v7x-class parts (2 TCs/chip), else 1 (v5e/v6e).  Best-effort."""
    try:
        kind = jax.devices()[0].device_kind.lower()
    except Exception:
        return 1
    return 2 if ("v7" in kind or "7x" in kind) else 1


def _pick_batch_tile(B, tb_cap, num_cores, row_bytes):
    """Lane-aligned batch tile: multiple of 128 when tiling, else full B."""
    cap = max(128, (tb_cap // 128) * 128)
    if B <= cap:
        # Only split a single-tile batch on multi-TC parts (v7x), and only when
        # each half is lane-aligned and carries >= ~2 MiB of X so the extra
        # grid step is not pure overhead.
        half = B // 2
        if num_cores >= 2 and B % 256 == 0 and half * row_bytes >= (2 << 20):
            return half
        return B
    if B % 128 == 0:
        # Prefer an even tile that divides B exactly (balanced work, no partial
        # tail -- matters for v7x 2-TC sharding of the batch axis).
        t = cap
        while t >= 128 and B % t != 0:
            t -= 128
        if t >= max(128, cap // 2):
            return t
    return cap  # partial, output-masked last tile


def multi_objective_analytic_acquisition(X, params, *, tb=8192, in_dtype=None):
    """X: (B, 1, d) array -> (B,) acquisition values.

    `in_dtype=jnp.bfloat16` halves HBM traffic for X / head weights (biggest
    relative gain on v5e); the MXU still accumulates in f32 and all post-matmul
    EI math stays f32.  Default keeps X's own dtype (no wrapper-side HBM pass).
    """
    B, q, D = X.shape
    assert q == 1, "MultiObjectiveAnalyticAcquisitionFunction expects q == 1"
    M = params["w_mean"].shape[1]
    mp = max(8, ((M + 7) // 8) * 8)          # pad each head to an 8-row boundary

    x2d = X.reshape(B, D)
    if in_dtype is not None and x2d.dtype != in_dtype:
        x2d = x2d.astype(in_dtype)
    dt = x2d.dtype

    def pad_rows(a):                          # (r, c) -> (mp, c), zero-padded
        return jnp.pad(a, ((0, mp - a.shape[0]), (0, 0)))

    def pad_vec(v):                           # (1, M) / (M,) -> (mp,)
        v = v.reshape(-1)
        return jnp.pad(v, (0, mp - v.shape[0]))

    # Fused head weights (2Mp, D) and packed per-objective constants (2Mp, 2).
    w_fused = jnp.concatenate(
        [pad_rows(params["w_mean"].T), pad_rows(params["w_std"].T)],
        axis=0).astype(dt)
    consts = jnp.stack(
        [jnp.concatenate([pad_vec(params["b_mean"]), pad_vec(params["b_std"])]),
         jnp.concatenate([pad_vec(params["w_obj"]), pad_vec(params["best_f"])])],
        axis=1).astype(jnp.float32)

    row_bytes = D * jnp.dtype(dt).itemsize
    tb_eff = _pick_batch_tile(B, tb, _num_tensorcores(), row_bytes)
    grid = (pl.cdiv(B, tb_eff),)

    out = pl.pallas_call(
        _moacq_kernel,
        out_shape=jax.ShapeDtypeStruct((1, B), jnp.float32),
        grid_spec=pltpu.PrefetchScalarGridSpec(
            num_scalar_prefetch=0,
            grid=grid,
            in_specs=[
                pl.BlockSpec((tb_eff, D), lambda i: (i, 0)),   # X tile (natural)
                pl.BlockSpec((2 * mp, D), lambda i: (0, 0)),   # fused head weights
                pl.BlockSpec((2 * mp, 2), lambda i: (0, 0)),   # packed constants
            ],
            out_specs=pl.BlockSpec((1, tb_eff), lambda i: (0, i)),
        ),
        # Per-step VMEM footprint at tb=8192 f32 is a few MiB -> under even
        # v5e's 16 MiB scoped default; no vmem_limit_bytes override needed.
        compiler_params=pltpu.CompilerParams(
            dimension_semantics=("parallel",)),
    )(x2d, w_fused, consts)

    return out.reshape(B)


def _reference(X, params):
    x = X.reshape(X.shape[0], -1).astype(jnp.float32)
    mean = x @ params["w_mean"] + params["b_mean"]
    sigma = jax.nn.softplus(x @ params["w_std"] + params["b_std"]) + 1e-6
    diff = mean - params["best_f"]
    u = diff / sigma
    cdf = 0.5 * (1.0 + lax.erf(u * _INV_SQRT_2))
    pdf = _INV_SQRT_2PI * jnp.exp(-0.5 * u * u)
    ei = diff * cdf + sigma * pdf
    return jnp.sum(ei * params["w_obj"], axis=-1)


def _make_params(key, d, m):
    k1, k2, k3, k4, k5, k6 = jax.random.split(key, 6)
    return {
        "w_mean": jax.random.normal(k1, (d, m), jnp.float32) * 0.3,
        "b_mean": jax.random.normal(k2, (1, m), jnp.float32) * 0.1,
        "w_std": jax.random.normal(k3, (d, m), jnp.float32) * 0.2,
        "b_std": jax.random.normal(k4, (1, m), jnp.float32) * 0.1,
        "w_obj": jax.nn.softmax(jax.random.normal(k5, (1, m), jnp.float32)),
        "best_f": jax.random.normal(k6, (1, m), jnp.float32) * 0.5,
    }


if __name__ == "__main__":
    key = jax.random.PRNGKey(0)
    kx, kx2, kx3, kx4, kp = jax.random.split(key, 5)

    D, M = 32, 4                       # d = 32 design dims, 4 objectives
    params = _make_params(kp, D, M)

    # 1) Primary case: lane-aligned batch, single full-batch tile.
    B = 256
    X = jax.random.normal(kx, (B, 1, D), jnp.float32)
    acq = jax.block_until_ready(multi_objective_analytic_acquisition(X, params))
    ref = _reference(X, params)
    assert acq.shape == (B,)
    assert jnp.allclose(acq, ref, atol=1e-2, rtol=1e-2), (acq, ref)

    # 2) Tiny batch (single small tile path).
    B2 = 8
    X2 = jax.random.normal(kx2, (B2, 1, D), jnp.float32)
    acq2 = jax.block_until_ready(
        multi_objective_analytic_acquisition(X2, params))
    ref2 = _reference(X2, params)
    assert acq2.shape == (B2,)
    assert jnp.allclose(acq2, ref2, atol=1e-2, rtol=1e-2), (acq2, ref2)

    # 3) Tiled path with a small forced tile cap: balanced divisor tiles
    #    (B=640 -> 5 x 128) and a partial output-masked last tile (B=200).
    B3 = 640
    X3 = jax.random.normal(kx3, (B3, 1, D), jnp.float32)
    acq3 = jax.block_until_ready(
        multi_objective_analytic_acquisition(X3, params, tb=256))
    assert acq3.shape == (B3,)
    assert jnp.allclose(acq3, _reference(X3, params), atol=1e-2, rtol=1e-2)

    B4 = 200
    X4 = jax.random.normal(kx4, (B4, 1, D), jnp.float32)
    acq4 = jax.block_until_ready(
        multi_objective_analytic_acquisition(X4, params, tb=128))
    assert acq4.shape == (B4,)
    assert jnp.allclose(acq4, _reference(X4, params), atol=1e-2, rtol=1e-2)

    # 4) bf16 transport path (looser tolerance: X / weights quantized to bf16).
    acq_bf16 = jax.block_until_ready(
        multi_objective_analytic_acquisition(X, params, in_dtype=jnp.bfloat16))
    assert acq_bf16.shape == (B,)
    assert jnp.allclose(acq_bf16, ref, atol=0.25, rtol=0.1)

    print("KERNEL_OK")
</pallas_src>

<mosaic_0001>
module attributes {stable_mosaic.version = 11 : i64} {
  func.func @_moacq_kernel(%arg0: i32, %arg1: memref<256x32xf32, #tpu.memory_space<vmem>>, %arg2: memref<16x32xf32, #tpu.memory_space<vmem>>, %arg3: memref<16x2xf32, #tpu.memory_space<vmem>>, %arg4: memref<1x256xf32, #tpu.memory_space<vmem>>) attributes {dimension_semantics = [#tpu.dimension_semantics<parallel>], iteration_bounds = array<i64: 1>, scalar_prefetch = 0 : i64, scratch_operands = 0 : i64, tpu.core_type = #tpu.core_type<tc>, window_params = [{transform_indices = @transform_0, window_bounds = array<i64: 256, 32>}, {pipeline_mode = #tpu.pipeline_mode<synchronous>, transform_indices = @transform_1, window_bounds = array<i64: 16, 32>}, {pipeline_mode = #tpu.pipeline_mode<synchronous>, transform_indices = @transform_2, window_bounds = array<i64: 16, 2>}, {transform_indices = @transform_3, window_bounds = array<i64: 1, 256>}]} {
    %c0 = arith.constant 0 : index
    %c0_0 = arith.constant 0 : index
    %0 = vector.load %arg2[%c0, %c0_0] : memref<16x32xf32, #tpu.memory_space<vmem>>, vector<16x32xf32>
    %c0_1 = arith.constant 0 : index
    %c0_2 = arith.constant 0 : index
    %1 = vector.load %arg1[%c0_1, %c0_2] : memref<256x32xf32, #tpu.memory_space<vmem>>, vector<256x32xf32>
    %cst = arith.constant dense<0.000000e+00> : vector<16x256xf32>
    %2 = tpu.matmul %0, %1, %cst {dimension_numbers = #tpu.dot_dimension_numbers<[1], [1], [0], [0], [0, 0, 1, 0], [], []>} : vector<16x32xf32>, vector<256x32xf32>, vector<16x256xf32> -> vector<16x256xf32>
    %c0_3 = arith.constant 0 : index
    %c0_4 = arith.constant 0 : index
    %3 = vector.load %arg3[%c0_3, %c0_4] : memref<16x2xf32, #tpu.memory_space<vmem>>, vector<16x2xf32>
    %4 = vector.extract_strided_slice %3 {offsets = [0, 0], sizes = [16, 1], strides = [1, 1]} : vector<16x2xf32> to vector<16x1xf32>
    %5 = vector.broadcast %4 : vector<16x1xf32> to vector<16x256xf32>
    %6 = arith.addf %2, %5 : vector<16x256xf32>
    %7 = vector.extract_strided_slice %6 {offsets = [0, 0], sizes = [8, 256], strides = [1, 1]} : vector<16x256xf32> to vector<8x256xf32>
    %8 = vector.extract_strided_slice %6 {offsets = [8, 0], sizes = [8, 256], strides = [1, 1]} : vector<16x256xf32> to vector<8x256xf32>
    %9 = vector.extract_strided_slice %3 {offsets = [0, 1], sizes = [8, 1], strides = [1, 1]} : vector<16x2xf32> to vector<8x1xf32>
    %10 = vector.extract_strided_slice %3 {offsets = [8, 1], sizes = [8, 1], strides = [1, 1]} : vector<16x2xf32> to vector<8x1xf32>
    %cst_5 = arith.constant 2.000000e+01 : f32
    %11 = vector.broadcast %cst_5 : f32 to vector<8x256xf32>
    %12 = arith.cmpf ogt, %8, %11 : vector<8x256xf32>
    %cst_6 = arith.constant 2.000000e+01 : f32
    %13 = vector.broadcast %cst_6 : f32 to vector<8x256xf32>
    %14 = arith.minimumf %8, %13 : vector<8x256xf32>
    %15 = math.exp %14 : vector<8x256xf32>
    %16 = math.log1p %15 : vector<8x256xf32>
    %17 = arith.select %12, %8, %16 : vector<8x256xi1>, vector<8x256xf32>
    %cst_7 = arith.constant 9.99999997E-7 : f32
    %18 = vector.broadcast %cst_7 : f32 to vector<8x256xf32>
    %19 = arith.addf %17, %18 : vector<8x256xf32>
    %20 = tpu.reciprocal %19 {approx = true} : vector<8x256xf32> -> vector<8x256xf32>
    %21 = vector.broadcast %10 : vector<8x1xf32> to vector<8x256xf32>
    %22 = arith.subf %7, %21 : vector<8x256xf32>
    %23 = arith.mulf %22, %20 : vector<8x256xf32>
    %cst_8 = arith.constant 0.707106769 : f32
    %24 = vector.broadcast %cst_8 : f32 to vector<8x256xf32>
    %25 = arith.mulf %23, %24 : vector<8x256xf32>
    %26 = math.erf %25 : vector<8x256xf32>
    %cst_9 = arith.constant 1.000000e+00 : f32
    %27 = vector.broadcast %cst_9 : f32 to vector<8x256xf32>
    %28 = arith.addf %27, %26 : vector<8x256xf32>
    %cst_10 = arith.constant 5.000000e-01 : f32
    %29 = vector.broadcast %cst_10 : f32 to vector<8x256xf32>
    %30 = arith.mulf %29, %28 : vector<8x256xf32>
    %cst_11 = arith.constant -5.000000e-01 : f32
    %31 = vector.broadcast %cst_11 : f32 to vector<8x256xf32>
    %32 = arith.mulf %31, %23 : vector<8x256xf32>
    %33 = arith.mulf %32, %23 : vector<8x256xf32>
    %34 = math.exp %33 : vector<8x256xf32>
    %cst_12 = arith.constant 0.398942292 : f32
    %35 = vector.broadcast %cst_12 : f32 to vector<8x256xf32>
    %36 = arith.mulf %35, %34 : vector<8x256xf32>
    %37 = arith.mulf %22, %30 : vector<8x256xf32>
    %38 = arith.mulf %19, %36 : vector<8x256xf32>
    %39 = arith.addf %37, %38 : vector<8x256xf32>
    %40 = vector.broadcast %9 : vector<8x1xf32> to vector<8x256xf32>
    %41 = arith.mulf %39, %40 : vector<8x256xf32>
    %cst_13 = arith.constant dense<0.000000e+00> : vector<256xf32>
    %42 = vector.multi_reduction <add>, %41, %cst_13 [0] : vector<8x256xf32> to vector<256xf32>
    %43 = vector.shape_cast %42 : vector<256xf32> to vector<1x256xf32>
    %c0_14 = arith.constant 0 : index
    %c0_15 = arith.constant 0 : index
    %44 = vector.load %arg4[%c0_14, %c0_15] : memref<1x256xf32, #tpu.memory_space<vmem>>, vector<1x256xf32>
    tpu.vector_store %arg4[%c0_14, %c0_15], %43 {strides = array<i32>} : memref<1x256xf32, #tpu.memory_space<vmem>>, vector<1x256xf32>,
    return
  }
  func.func @transform_0(%arg0: i32) -> (i32, i32) {
    %c0_i32 = arith.constant 0 : i32
    %c0_i32_0 = arith.constant 0 : i32
    return %arg0, %c0_i32 : i32, i32
  }
  func.func @transform_1(%arg0: i32) -> (i32, i32) {
    %c0_i32 = arith.constant 0 : i32
    %c0_i32_0 = arith.constant 0 : i32
    %c0_i32_1 = arith.constant 0 : i32
    return %c0_i32, %c0_i32_0 : i32, i32
  }
  func.func @transform_2(%arg0: i32) -> (i32, i32) {
    %c0_i32 = arith.constant 0 : i32
    %c0_i32_0 = arith.constant 0 : i32
    %c0_i32_1 = arith.constant 0 : i32
    return %c0_i32, %c0_i32_0 : i32, i32
  }
  func.func @transform_3(%arg0: i32) -> (i32, i32) {
    %c0_i32 = arith.constant 0 : i32
    %c0_i32_0 = arith.constant 0 : i32
    return %c0_i32, %arg0 : i32, i32
  }
}

</mosaic_0001>

<llo_original>
// kernel: tpu_custom_call.1
$region0: #{tpu_custom_call.1}
  #allocation0 [shape = 'u32[]', space=smem, size = 0x4, offset = 0x4, fixed_abs, tag = 'smem constant byte address 0x4 - core index']
  #allocation1 [shape = 'u32[144,128]{1,0:T(1,128)}', space=vmem, size = 0x12000, scoped, tag = 'internal scratch']
  %s0 = inlined_call_operand.vmem [shape: f32[256,32], index: 0, kind: input, shape index: {}]
  %s1 = inlined_call_operand.vmem [shape: f32[16,32], index: 1, kind: input, shape index: {}]
  %s2 = inlined_call_operand.vmem [shape: f32[16,2], index: 2, kind: input, shape index: {}]
  %s3 = inlined_call_operand.hbm [shape: f32[1,256], index: 3, kind: output, shape index: {}]
  %s4 = sld [smem:[#allocation0]]
  $region22: #{tpu_custom_call.1} parent=0
    _
  %s6 = ssub.s32 1, %s4
  %s7 = scalar_select 0, %s6, %s4
  $region1: #{tpu_custom_call.1} parent=0
    #allocation2 [shape = 'u8[1024]{0}', space=vmem, size = 0x400, scoped, tag = 'output window, operand 0, single buffered']
    #allocation3 [shape = 's32[1]{0}', space=sflag, size = 0x4, scoped, tag = 'scoped memory for tpu_custom_call.1']
    %8 = vsyncpa [#allocation3], 0
    // Predicated region
    $region2: #{tpu_custom_call.1} parent=1 // pred_check
      _
    $region3: #{tpu_custom_call.1} parent=1 // pred_check_branch
      %10 = sbr.rel (0) target = $region5
    $region4: #{tpu_custom_call.1} parent=1 // pred_region
      _
    $region5: #{tpu_custom_call.1} parent=1 // pred_fallthru
      _
    // Predicated region
    $region6: #{tpu_custom_call.1} parent=1 // pred_check
      _
    $region7: #{tpu_custom_call.1} parent=1 // pred_check_branch
      %12 = sbr.rel (0) target = $region9
    $region8: #{tpu_custom_call.1} parent=1 // pred_region
      _
    $region9: #{tpu_custom_call.1} parent=1 // pred_fallthru
      _
    // Predicated region
    $region10: #{tpu_custom_call.1} parent=1 // pred_check
      _
    $region11: #{tpu_custom_call.1} parent=1 // pred_check_branch
      %14 = sbr.rel (0) target = $region13
    $region12: #{tpu_custom_call.1} parent=1 // pred_region
      _
    $region13: #{tpu_custom_call.1} parent=1 // pred_fallthru
      _
    %v15 = vld [vmem:[%s1] sm:$0xff]
    %v16 = vld [vmem:[%s1 + $0x8] sm:$0xff]
    %v17 = vld [vmem:[%s0] sm:$0xff]
    %v18 = vld [vmem:[%s0 + $0x8] sm:$0xff]
    %v19 = vld [vmem:[%s0 + $0x10] sm:$0xff]
    %v20 = vld [vmem:[%s0 + $0x18] sm:$0xff]
    %v21 = vld [vmem:[%s0 + $0x20] sm:$0xff]
    %v22 = vld [vmem:[%s0 + $0x28] sm:$0xff]
    %v23 = vld [vmem:[%s0 + $0x30] sm:$0xff]
    %v24 = vld [vmem:[%s0 + $0x38] sm:$0xff]
    %v25 = vld [vmem:[%s0 + $0x40] sm:$0xff]
    %v26 = vld [vmem:[%s0 + $0x48] sm:$0xff]
    %v27 = vld [vmem:[%s0 + $0x50] sm:$0xff]
    %v28 = vld [vmem:[%s0 + $0x58] sm:$0xff]
    %v29 = vld [vmem:[%s0 + $0x60] sm:$0xff]
    %v30 = vld [vmem:[%s0 + $0x68] sm:$0xff]
    %v31 = vld [vmem:[%s0 + $0x70] sm:$0xff]
    %v32 = vld [vmem:[%s0 + $0x78] sm:$0xff]
    %v33 = vld [vmem:[%s0 + $0x80] sm:$0xff]
    %v34 = vld [vmem:[%s0 + $0x88] sm:$0xff]
    %v35 = vld [vmem:[%s0 + $0x90] sm:$0xff]
    %v36 = vld [vmem:[%s0 + $0x98] sm:$0xff]
    %v37 = vld [vmem:[%s0 + $0xa0] sm:$0xff]
    %v38 = vld [vmem:[%s0 + $0xa8] sm:$0xff]
    %v39 = vld [vmem:[%s0 + $0xb0] sm:$0xff]
    %v40 = vld [vmem:[%s0 + $0xb8] sm:$0xff]
    %v41 = vld [vmem:[%s0 + $0xc0] sm:$0xff]
    %v42 = vld [vmem:[%s0 + $0xc8] sm:$0xff]
    %v43 = vld [vmem:[%s0 + $0xd0] sm:$0xff]
    %v44 = vld [vmem:[%s0 + $0xd8] sm:$0xff]
    %v45 = vld [vmem:[%s0 + $0xe0] sm:$0xff]
    %v46 = vld [vmem:[%s0 + $0xe8] sm:$0xff]
    %v47 = vld [vmem:[%s0 + $0xf0] sm:$0xff]
    %v48 = vld [vmem:[%s0 + $0xf8] sm:$0xff]
    %v49 = vld [vmem:[%s2] sm:$0xff]
    %v50 = vld [vmem:[%s2 + $0x8] sm:$0xff]
    %52 = vset.pattern.permute.xlu0 0
    %53 = vperm.xlu0 %52, %v49
    %v54 = vpop.permute.xlu0 %53
    %57 = vset.pattern.permute.xlu0 0
    %58 = vperm.xlu0 %57, %v50
    %v59 = vpop.permute.xlu0 %58
    %vm61 = vcmask 261120
    %v63 = vsel %vm61, %v15, 0
    %v66 = vsel %vm61, %v16, 0
    %v69 = vsel %vm61, %v17, 0
    %v72 = vsel %vm61, %v18, 0
    %v75 = vsel %vm61, %v19, 0
    %v78 = vsel %vm61, %v20, 0
    %v81 = vsel %vm61, %v21, 0
    %v84 = vsel %vm61, %v22, 0
    %v87 = vsel %vm61, %v23, 0
    %v90 = vsel %vm61, %v24, 0
    %v93 = vsel %vm61, %v25, 0
    %v96 = vsel %vm61, %v26, 0
    %v99 = vsel %vm61, %v27, 0
    %v102 = vsel %vm61, %v28, 0
    %v105 = vsel %vm61, %v29, 0
    %v108 = vsel %vm61, %v30, 0
    %v111 = vsel %vm61, %v31, 0
    %v114 = vsel %vm61, %v32, 0
    %v117 = vsel %vm61, %v33, 0
    %v120 = vsel %vm61, %v34, 0
    %v123 = vsel %vm61, %v35, 0
    %v126 = vsel %vm61, %v36, 0
    %v129 = vsel %vm61, %v37, 0
    %v132 = vsel %vm61, %v38, 0
    %v135 = vsel %vm61, %v39, 0
    %v138 = vsel %vm61, %v40, 0
    %v141 = vsel %vm61, %v41, 0
    %v144 = vsel %vm61, %v42, 0
    %v147 = vsel %vm61, %v43, 0
    %v150 = vsel %vm61, %v44, 0
    %v153 = vsel %vm61, %v45, 0
    %v156 = vsel %vm61, %v46, 0
    %v159 = vsel %vm61, %v47, 0
    %v162 = vsel %vm61, %v48, 0
    %164 = vmatprep.subr.mxu0 0.0
    %165 = vmatpush1.xpose.msra.mxu0 %v69
    %166 = vmatprep.subr.mxu0 0.0
    %167 = vmatpush1.xpose.msra.mxu0 %v72
    %168 = vmatprep.subr.mxu0 0.0
    %169 = vmatpush1.xpose.msra.mxu0 %v75
    %170 = vmatprep.subr.mxu0 0.0
    %171 = vmatpush1.xpose.msra.mxu0 %v78
    %172 = vmatprep.subr.mxu0 0.0
    %173 = vmatpush1.xpose.msra.mxu0 %v81
    %174 = vmatprep.subr.mxu0 0.0
    %175 = vmatpush1.xpose.msra.mxu0 %v84
    %176 = vmatprep.subr.mxu0 0.0
    %177 = vmatpush1.xpose.msra.mxu0 %v87
    %178 = vmatprep.subr.mxu0 0.0
    %179 = vmatpush1.xpose.msra.mxu0 %v90
    %180 = vmatprep.subr.mxu0 0.0
    %181 = vmatpush1.xpose.msra.mxu0 %v93
    %182 = vmatprep.subr.mxu0 0.0
    %183 = vmatpush1.xpose.msra.mxu0 %v96
    %184 = vmatprep.subr.mxu0 0.0
    %185 = vmatpush1.xpose.msra.mxu0 %v99
    %186 = vmatprep.subr.mxu0 0.0
    %187 = vmatpush1.xpose.msra.mxu0 %v102
    %188 = vmatprep.subr.mxu0 0.0
    %189 = vmatpush1.xpose.msra.mxu0 %v105
    %190 = vmatprep.subr.mxu0 0.0
    %191 = vmatpush1.xpose.msra.mxu0 %v108
    %192 = vmatprep.subr.mxu0 0.0
    %193 = vmatpush1.xpose.msra.mxu0 %v111
    %194 = vmatprep.subr.mxu0 0.0
    %195 = vmatpush1.xpose.msra.mxu0 %v114
    %196 = vmatprep.subr.mxu0 0.0
    %197 = vmatpush1.xpose.msra.mxu0 %v117
    %198 = vmatprep.subr.mxu0 0.0
    %199 = vmatpush1.xpose.msra.mxu0 %v120
    %200 = vmatprep.subr.mxu0 0.0
    %201 = vmatpush1.xpose.msra.mxu0 %v123
    %202 = vmatprep.subr.mxu0 0.0
    %203 = vmatpush1.xpose.msra.mxu0 %v126
    %204 = vmatprep.subr.mxu0 0.0
    %205 = vmatpush1.xpose.msra.mxu0 %v129
    %206 = vmatprep.subr.mxu0 0.0
    %207 = vmatpush1.xpose.msra.mxu0 %v132
    %208 = vmatprep.subr.mxu0 0.0
    %209 = vmatpush1.xpose.msra.mxu0 %v135
    %210 = vmatprep.subr.mxu0 0.0
    %211 = vmatpush1.xpose.msra.mxu0 %v138
    %212 = vmatprep.subr.mxu0 0.0
    %213 = vmatpush1.xpose.msra.mxu0 %v141
    %214 = vmatprep.subr.mxu0 0.0
    %215 = vmatpush1.xpose.msra.mxu0 %v144
    %216 = vmatprep.subr.mxu0 0.0
    %217 = vmatpush1.xpose.msra.mxu0 %v147
    %218 = vmatprep.subr.mxu0 0.0
    %219 = vmatpush1.xpose.msra.mxu0 %v150
    %220 = vmatprep.subr.mxu0 0.0
    %221 = vmatpush1.xpose.msra.mxu0 %v153
    %222 = vmatprep.subr.mxu0 0.0
    %223 = vmatpush1.xpose.msra.mxu0 %v156
    %224 = vmatprep.subr.mxu0 0.0
    %225 = vmatpush1.xpose.msra.mxu0 %v159
    %226 = vmatprep.subr.mxu0 0.0
    %227 = vmatpush1.xpose.msra.mxu0 %v162
    %228 = vmatprep.mubr.f32.mxu0 0.0
    %229 = vmatmul.mubr.f32.gmra.mrb[0].mxu0 %v63
    %v230 = vpop.f32.mrb[0].mxu0
    %v231 = vadd.f32 %v54, %v230
    %v232 = vpop.f32.mrb[0].mxu0
    %v233 = vadd.f32 %v54, %v232
    %234 = vmatprep.mubr.f32.mxu0 0.0
    %235 = vmatmul.mubr.f32.gmra.mrb[0].mxu0 %v66
    %v236 = vpop.f32.mrb[0].mxu0
    %v237 = vadd.f32 %v59, %v236
    %v238 = vpop.f32.mrb[0].mxu0
    %v239 = vadd.f32 %v59, %v238
    %240 = vdwg.mxu0
    %vm241 = vcmp.gt.f32.partialorder %v237, 20.0
    %vm242 = vcmp.gt.f32.partialorder %v239, 20.0
    %v243 = vmin.f32 %v237, 20.0
    %v244 = vmin.f32 %v239, 20.0
    %v245 = vmul.f32 %v243, 1.442695
    %v246 = vpow.pop %v245
    %v247 = vmul.f32 %v244, 1.442695
    %v248 = vpow.pop %v247
    %v249 = vadd.f32 %v246, 1.0
    %v250 = vlog2.pop %v249
    %v251 = vmul.f32 %v250, 0.6931472
    %v252 = vmul.f32 -0.5, %v246
    %v253 = vadd.f32 %v252, 1.0
    %v254 = vmul.f32 %v253, %v246
    %v255 = vand.u32 2147483647, %v246
    %vm256 = vcmp.lt.f32.partialorder %v255, 0.0004427343
    %v257 = vsel %vm256, %v254, %v251
    %v258 = vadd.f32 %v248, 1.0
    %v259 = vlog2.pop %v258
    %v260 = vmul.f32 %v259, 0.6931472
    %v261 = vmul.f32 -0.5, %v248
    %v262 = vadd.f32 %v261, 1.0
    %v263 = vmul.f32 %v262, %v248
    %v264 = vand.u32 2147483647, %v248
    %vm265 = vcmp.lt.f32.partialorder %v264, 0.0004427343
    %v266 = vsel %vm265, %v263, %v260
    %v267 = vsel %vm241, %v237, %v257
    %v268 = vsel %vm242, %v239, %v266
    %v269 = vadd.f32 %v267, 1e-06
    %v270 = vadd.f32 %v268, 1e-06
    %v271 = vrcp.pop %v269
    %v272 = vrcp.pop %v270
    %273 = vset.pattern.permute.xlu0 1
    %274 = vperm.xlu0 %273, %v50
    %v275 = vpop.permute.xlu0 %274
    %v277 = vsub.f32 %v231, %v275
    %v278 = vsub.f32 %v233, %v275
    %v279 = vmul.f32 %v277, %v271
    %v280 = vmul.f32 %v278, %v272
    %v281 = vmul.f32 %v279, 0.70710677
    %v282 = vmul.f32 %v280, 0.70710677
    %v283 = verf.f32.pop %v281
    %v284 = verf.f32.pop %v282
    %v285 = vadd.f32 %v283, 1.0
    %v286 = vadd.f32 %v284, 1.0
    %v287 = vmul.f32 %v285, 0.5
    %v288 = vmul.f32 %v286, 0.5
    %v289 = vmul.f32 %v279, -0.5
    %v290 = vmul.f32 %v280, -0.5
    %v291 = vmul.f32 %v289, %v279
    %v292 = vmul.f32 %v290, %v280
    %v293 = vmul.f32 %v291, 1.442695
    %v294 = vpow.pop %v293
    %v295 = vmul.f32 %v292, 1.442695
    %v296 = vpow.pop %v295
    %v297 = vmul.f32 %v294, 0.3989423
    %v298 = vmul.f32 %v296, 0.3989423
    %v299 = vmul.f32 %v277, %v287
    %v300 = vmul.f32 %v278, %v288
    %v301 = vmul.f32 %v269, %v297
    %v302 = vmul.f32 %v270, %v298
    %v303 = vadd.f32 %v299, %v301
    %v304 = vadd.f32 %v300, %v302
    %305 = vset.pattern.permute.xlu0 1
    %306 = vperm.xlu0 %305, %v49
    %v307 = vpop.permute.xlu0 %306
    %v309 = vmul.f32 %v303, %v307
    %v310 = vmul.f32 %v304, %v307
    %v311 = vrot.slane %v309, 4
    %v312 = vadd.f32 %v309, %v311
    %v313 = vrot.slane %v312, 2
    %v314 = vadd.f32 %v312, %v313
    %v315 = vrot.slane %v314, 1
    %v316 = vadd.f32 %v314, %v315
    %v317 = vrot.slane %v310, 4
    %v318 = vadd.f32 %v310, %v317
    %v319 = vrot.slane %v318, 2
    %v320 = vadd.f32 %v318, %v319
    %v321 = vrot.slane %v320, 1
    %v322 = vadd.f32 %v320, %v321
    %v325 = vcombine.low %v316, %v322
    %v327 = vunpack.c.l.s4 1966171168
    %v328 = vunpack.c.0.s8 %v327
    %v329 = vlaneseq
    %v330 = vshrl.u32 %v329, 7
    %v331 = vsub.s32 %v328, %v330
    %v332 = vrot.slane %v325, %v331
    %v334 = vunpack.c.l.s4 1966171168
    %v335 = vunpack.c.0.s8 %v334
    %v336 = vlaneseq
    %v337 = vshrl.u32 %v336, 7
    %v338 = vsub.s32 %v335, %v337
    %v339 = vrot.slane %v332, %v338
    %v341 = vlaneseq
    %vm342 = vcmp.ge.s32.totalorder %v341, 0
    %vm343 = vcmp.lt.s32.totalorder %v341, 256
    %vm344 = vmand %vm342, %vm343
    %345 = vst.msk [vmem:[#allocation2] sm:$0x3] %vm344, %v339
    // Predicated region
    $region14: #{tpu_custom_call.1} parent=1 // pred_check
      _
    $region15: #{tpu_custom_call.1} parent=1 // pred_check_branch
      %347 = sbr.rel (0) target = $region17
    $region16: #{tpu_custom_call.1} parent=1 // pred_region
      %s349 = ssub.s32 32, 32
      %350 = vsyncadd [#allocation3], %s349
      %s352 = sshll.u32 [#allocation2], 4
      %s353 = int_to_ptr.vmem [resolvable:$true] %s352
      %355 = dma.vmem_to_hbm [thread:$0]  %s353, 32, %s3, [#allocation3]
    $region17: #{tpu_custom_call.1} parent=1 // pred_fallthru
      _
    // Predicated region
    $region18: #{tpu_custom_call.1} parent=1 // pred_check
      _
    $region19: #{tpu_custom_call.1} parent=1 // pred_check_branch
      %357 = sbr.rel (0) target = $region21
    $region20: #{tpu_custom_call.1} parent=1 // pred_region
      %358 = dma.done [#allocation3], 32
    $region21: #{tpu_custom_call.1} parent=1 // pred_fallthru
      _
    %359 = vsyncpa [#allocation3], 1

</llo_original>
